<compile_context>
chip_gen: v7x
topology: tpu7x:2x2x1
jax: 0.10.0
libtpu: 0.0.40
codegen_flags: <defaults>
</compile_context>

<pallas_src>
import functools

import jax
import jax.numpy as jnp
from jax.experimental import pallas as pl
from jax.experimental.pallas import tpu as pltpu


def _round_up(n, m):
    return ((n + m - 1) // m) * m


def _vmem_capacity():
    """Per-core VMEM capacity in bytes (conservative 64 MiB fallback)."""
    try:
        cap = int(getattr(pltpu.get_tpu_info(), "vmem_capacity_bytes", 0))
        if cap > 0:
            return cap
    except Exception:
        pass
    return 64 << 20  # v7x per-TensorCore VMEM


def _is_v5():
    try:
        return "v5" in jax.devices()[0].device_kind.lower()
    except Exception:
        return False


def _pick_block_b(batch, kp, hp, cp, vmem_cap, weight_buffers):
    """Batch-tile rows: multiple of 16 (bf16 sublane packing), deep enough
    grid for DMA/compute overlap, shrunk so the fused kernel fits VMEM."""
    big_vmem = vmem_cap >= (96 << 20)          # v5e/v6e (128 MiB) vs v7x (64 MiB)
    target = 1024 if (big_vmem and not _is_v5()) else 512
    block = min(target, _round_up(batch, 16))

    # Keep x/out DMAs overlapped with compute: >= 2 steps per TensorCore.
    # v7x has 2 TCs and only 64 MiB VMEM -> require >= 4 grid steps.
    min_steps = 2 if big_vmem else 4
    if batch > min_steps * 16:
        block = min(block, _round_up(pl.cdiv(batch, min_steps), 16))
    elif batch > 16:
        block = min(block, _round_up(pl.cdiv(batch, 2), 16))

    # VMEM budget: resident weights + double-buffered f32 x/out tiles +
    # live hidden intermediates (one f32 + one bf16 (block, hp) slab).
    budget = max(vmem_cap - (14 << 20), 16 << 20)
    weight_bytes = weight_buffers * (2 * (kp * hp + hp * hp + hp * cp)
                                     + 4 * (2 * hp + cp))

    def fits(b):
        per_step = 2 * b * kp * 4 + 2 * b * cp * 4 + b * hp * (4 + 2)
        return weight_bytes + per_step <= budget

    while block > 16 and not fits(block):
        block = max(16, _round_up(block // 2, 16))
    return max(16, block)


def _resident_spec(shape, single_buffer):
    """Full-tensor, VMEM-resident operand (constant index_map). When the
    installed jax supports it, request a single pipeline buffer."""
    imap = lambda i: (0,) * len(shape)
    if single_buffer:
        try:
            return pl.BlockSpec(shape, imap, pipeline_mode=pl.Buffered(1))
        except (TypeError, ValueError):
            pass
    return pl.BlockSpec(shape, imap)


def _mlp_kernel(x_ref, w1_ref, b1_ref, w2_ref, b2_ref, w3_ref, b3_ref, o_ref):
    # Layer 1: cast the x tile to bf16 in-kernel (no wrapper-side HBM pass),
    # MXU matmul with f32 accumulation; bias + ReLU in f32, then narrow to
    # bf16 immediately so the f32 intermediate's live range ends here.
    h = jnp.dot(x_ref[...].astype(jnp.bfloat16), w1_ref[...],
                preferred_element_type=jnp.float32)
    h = jnp.maximum(h + b1_ref[...], 0.0).astype(jnp.bfloat16)
    # Layer 2.
    h = jnp.dot(h, w2_ref[...], preferred_element_type=jnp.float32)
    h = jnp.maximum(h + b2_ref[...], 0.0).astype(jnp.bfloat16)
    # Layer 3 (logits, no activation).  Output tile is 128-lane dense.
    out = jnp.dot(h, w3_ref[...], preferred_element_type=jnp.float32) + b3_ref[...]
    o_ref[...] = out.astype(o_ref.dtype)


@functools.partial(jax.jit, static_argnames=("block_b", "single_buffer_weights"))
def _forward_impl(x, w1, b1, w2, b2, w3, b3, *, block_b, single_buffer_weights):
    batch, input_size = x.shape
    hidden_size = w1.shape[1]
    num_classes = w3.shape[1]
    out_dtype = x.dtype

    # Pad feature dims to 128 lanes (clean (8,128) layouts, lane-dense output).
    # TODO(synk): for num_classes << 128 and mem-bound (small-hidden, huge-
    # batch) configs, measure an unpadded masked-vst output vs. this 128-
    # padded write + wrapper slice.
    kp = _round_up(input_size, 128)
    hp = _round_up(hidden_size, 128)
    cp = _round_up(num_classes, 128)

    vmem_cap = _vmem_capacity()
    wbufs = 1 if single_buffer_weights else 2
    if block_b is None:
        block_b = _pick_block_b(batch, kp, hp, cp, vmem_cap, wbufs)
    else:
        block_b = max(16, _round_up(block_b, 16))
    bp = _round_up(batch, block_b)
    grid = (bp // block_b,)

    def pad2(a, rows, cols, dtype):
        a = a.astype(dtype)
        pr, pc = rows - a.shape[0], cols - a.shape[1]
        if pr or pc:
            a = jnp.pad(a, ((0, pr), (0, pc)))
        return a

    # x stays f32 (cast to bf16 inside the kernel); weights bf16; biases f32.
    xp = pad2(x, bp, kp, x.dtype)
    w1p = pad2(w1, kp, hp, jnp.bfloat16)
    w2p = pad2(w2, hp, hp, jnp.bfloat16)
    w3p = pad2(w3, hp, cp, jnp.bfloat16)
    b1p = pad2(b1.reshape(1, -1), 1, hp, jnp.float32)
    b2p = pad2(b2.reshape(1, -1), 1, hp, jnp.float32)
    b3p = pad2(b3.reshape(1, -1), 1, cp, jnp.float32)

    # Weights/biases are VMEM-resident across all batch tiles.
    # TODO(synk): if the bf16 weights alone exceed the VMEM budget (very
    # large hidden sizes), add a K/N grid axis over w2/w3 instead.
    resident = lambda shape: _resident_spec(shape, single_buffer_weights)

    # Advisory cost estimate for XLA's scheduler.
    flops = 2 * bp * (kp * hp + hp * hp + hp * cp)
    bytes_accessed = int(
        xp.size * 4 + (w1p.size + w2p.size + w3p.size) * 2
        + (b1p.size + b2p.size + b3p.size) * 4
        + bp * cp * jnp.dtype(out_dtype).itemsize)

    # Generation-aware VMEM budget: resident weights + double-buffered x/out
    # tiles + live hidden intermediates, capped at capacity minus headroom.
    weight_bytes = wbufs * (2 * (kp * hp + hp * hp + hp * cp) + 4 * (2 * hp + cp))
    per_step = (2 * block_b * kp * 4 + 2 * block_b * cp * 4
                + block_b * hp * (4 + 2))
    footprint = weight_bytes + per_step
    vmem_limit = int(min(max(2 * footprint, 16 << 20), vmem_cap - (14 << 20)))

    out_padded = pl.pallas_call(
        _mlp_kernel,
        out_shape=jax.ShapeDtypeStruct((bp, cp), out_dtype),
        grid_spec=pltpu.PrefetchScalarGridSpec(
            num_scalar_prefetch=0,
            grid=grid,
            in_specs=[
                pl.BlockSpec((block_b, kp), lambda i: (i, 0)),  # x tile (f32)
                resident((kp, hp)),   # w1
                resident((1, hp)),    # b1
                resident((hp, hp)),   # w2
                resident((1, hp)),    # b2
                resident((hp, cp)),   # w3
                resident((1, cp)),    # b3
            ],
            out_specs=pl.BlockSpec((block_b, cp), lambda i: (i, 0)),
        ),
        compiler_params=pltpu.CompilerParams(
            dimension_semantics=("parallel",),
            vmem_limit_bytes=vmem_limit),
        cost_estimate=pl.CostEstimate(
            flops=flops, transcendentals=0, bytes_accessed=bytes_accessed),
    )(xp, w1p, b1p, w2p, b2p, w3p, b3p)

    return out_padded[:batch, :num_classes]


def neural_net_forward(x, w1, b1, w2, b2, w3, b3, *, block_b=None):
    """Fused 3-layer MLP: relu(relu(x@w1+b1)@w2+b2)@w3+b3."""
    try:
        return _forward_impl(x, w1, b1, w2, b2, w3, b3,
                             block_b=block_b, single_buffer_weights=True)
    except Exception:
        # Fallback for jax versions / lowerings that reject pl.Buffered(1).
        return _forward_impl(x, w1, b1, w2, b2, w3, b3,
                             block_b=block_b, single_buffer_weights=False)


def init_params(key, input_size, hidden_size, num_classes, dtype=jnp.float32):
    """Deterministic init mimicking nn.Linear's uniform(-1/sqrt(fan_in), ...)."""
    ks = jax.random.split(key, 6)

    def linear(kw, kb, fan_in, fan_out):
        bound = 1.0 / jnp.sqrt(fan_in)
        w = jax.random.uniform(kw, (fan_in, fan_out), dtype, -bound, bound)
        b = jax.random.uniform(kb, (fan_out,), dtype, -bound, bound)
        return w, b

    w1, b1 = linear(ks[0], ks[1], input_size, hidden_size)
    w2, b2 = linear(ks[2], ks[3], hidden_size, hidden_size)
    w3, b3 = linear(ks[4], ks[5], hidden_size, num_classes)
    return w1, b1, w2, b2, w3, b3


if __name__ == "__main__":
    # Small shapes consistent with the module's forward.
    batch, input_size, hidden_size, num_classes = 8, 32, 64, 16

    key = jax.random.PRNGKey(0)
    kx, kparam = jax.random.split(key)
    x = jax.random.normal(kx, (batch, input_size), jnp.float32)
    params = init_params(kparam, input_size, hidden_size, num_classes)

    out = neural_net_forward(x, *params)
    out = jax.block_until_ready(out)
    assert out.shape == (batch, num_classes)

    w1, b1, w2, b2, w3, b3 = params

    # Reference along the same bf16-weight / f32-accumulate path (tight check).
    xb = x.astype(jnp.bfloat16)
    h = jnp.maximum(
        jnp.dot(xb, w1.astype(jnp.bfloat16),
                preferred_element_type=jnp.float32) + b1, 0.0)
    h = jnp.maximum(
        jnp.dot(h.astype(jnp.bfloat16), w2.astype(jnp.bfloat16),
                preferred_element_type=jnp.float32) + b2, 0.0)
    ref_bf16 = jnp.dot(h.astype(jnp.bfloat16), w3.astype(jnp.bfloat16),
                       preferred_element_type=jnp.float32) + b3
    assert jnp.allclose(out, ref_bf16, atol=2e-3, rtol=2e-3)

    # Loose sanity check against the pure-f32 PyTorch-equivalent forward.
    ref_f32 = jnp.maximum(x @ w1 + b1, 0.0)
    ref_f32 = jnp.maximum(ref_f32 @ w2 + b2, 0.0)
    ref_f32 = ref_f32 @ w3 + b3
    assert jnp.allclose(out, ref_f32, atol=5e-2, rtol=5e-2)

    print("KERNEL_OK")
</pallas_src>

<mosaic_0001>
module attributes {stable_mosaic.version = 11 : i64} {
  func.func @_mlp_kernel(%arg0: i32, %arg1: memref<16x128xf32, #tpu.memory_space<vmem>>, %arg2: memref<128x128xbf16, #tpu.memory_space<vmem>>, %arg3: memref<1x128xf32, #tpu.memory_space<vmem>>, %arg4: memref<128x128xbf16, #tpu.memory_space<vmem>>, %arg5: memref<1x128xf32, #tpu.memory_space<vmem>>, %arg6: memref<128x128xbf16, #tpu.memory_space<vmem>>, %arg7: memref<1x128xf32, #tpu.memory_space<vmem>>, %arg8: memref<16x128xf32, #tpu.memory_space<vmem>>) attributes {dimension_semantics = [#tpu.dimension_semantics<parallel>], iteration_bounds = array<i64: 1>, scalar_prefetch = 0 : i64, scratch_operands = 0 : i64, tpu.core_type = #tpu.core_type<tc>, window_params = [{transform_indices = @transform_0, window_bounds = array<i64: 16, 128>}, {pipeline_mode = #tpu.pipeline_mode<synchronous>, transform_indices = @transform_1, window_bounds = array<i64: 128, 128>}, {pipeline_mode = #tpu.pipeline_mode<synchronous>, transform_indices = @transform_2, window_bounds = array<i64: 1, 128>}, {pipeline_mode = #tpu.pipeline_mode<synchronous>, transform_indices = @transform_3, window_bounds = array<i64: 128, 128>}, {pipeline_mode = #tpu.pipeline_mode<synchronous>, transform_indices = @transform_4, window_bounds = array<i64: 1, 128>}, {pipeline_mode = #tpu.pipeline_mode<synchronous>, transform_indices = @transform_5, window_bounds = array<i64: 128, 128>}, {pipeline_mode = #tpu.pipeline_mode<synchronous>, transform_indices = @transform_6, window_bounds = array<i64: 1, 128>}, {transform_indices = @transform_7, window_bounds = array<i64: 16, 128>}]} {
    %c0 = arith.constant 0 : index
    %c0_0 = arith.constant 0 : index
    %0 = vector.load %arg1[%c0, %c0_0] : memref<16x128xf32, #tpu.memory_space<vmem>>, vector<16x128xf32>
    %1 = arith.truncf %0 : vector<16x128xf32> to vector<16x128xbf16>
    %c0_1 = arith.constant 0 : index
    %c0_2 = arith.constant 0 : index
    %2 = vector.load %arg2[%c0_1, %c0_2] : memref<128x128xbf16, #tpu.memory_space<vmem>>, vector<128x128xbf16>
    %cst = arith.constant dense<0.000000e+00> : vector<16x128xf32>
    %3 = tpu.matmul %1, %2, %cst {dimension_numbers = #tpu.dot_dimension_numbers<[1], [0], [0], [1], [0, 0, 1, 1], [], []>} : vector<16x128xbf16>, vector<128x128xbf16>, vector<16x128xf32> -> vector<16x128xf32>
    %c0_3 = arith.constant 0 : index
    %c0_4 = arith.constant 0 : index
    %4 = vector.load %arg3[%c0_3, %c0_4] : memref<1x128xf32, #tpu.memory_space<vmem>>, vector<1x128xf32>
    %5 = vector.broadcast %4 : vector<1x128xf32> to vector<16x128xf32>
    %6 = arith.addf %3, %5 : vector<16x128xf32>
    %cst_5 = arith.constant 0.000000e+00 : f32
    %7 = vector.broadcast %cst_5 : f32 to vector<16x128xf32>
    %8 = arith.maximumf %6, %7 : vector<16x128xf32>
    %9 = arith.truncf %8 : vector<16x128xf32> to vector<16x128xbf16>
    %c0_6 = arith.constant 0 : index
    %c0_7 = arith.constant 0 : index
    %10 = vector.load %arg4[%c0_6, %c0_7] : memref<128x128xbf16, #tpu.memory_space<vmem>>, vector<128x128xbf16>
    %cst_8 = arith.constant dense<0.000000e+00> : vector<16x128xf32>
    %11 = tpu.matmul %9, %10, %cst_8 {dimension_numbers = #tpu.dot_dimension_numbers<[1], [0], [0], [1], [0, 0, 1, 1], [], []>} : vector<16x128xbf16>, vector<128x128xbf16>, vector<16x128xf32> -> vector<16x128xf32>
    %c0_9 = arith.constant 0 : index
    %c0_10 = arith.constant 0 : index
    %12 = vector.load %arg5[%c0_9, %c0_10] : memref<1x128xf32, #tpu.memory_space<vmem>>, vector<1x128xf32>
    %13 = vector.broadcast %12 : vector<1x128xf32> to vector<16x128xf32>
    %14 = arith.addf %11, %13 : vector<16x128xf32>
    %cst_11 = arith.constant 0.000000e+00 : f32
    %15 = vector.broadcast %cst_11 : f32 to vector<16x128xf32>
    %16 = arith.maximumf %14, %15 : vector<16x128xf32>
    %17 = arith.truncf %16 : vector<16x128xf32> to vector<16x128xbf16>
    %c0_12 = arith.constant 0 : index
    %c0_13 = arith.constant 0 : index
    %18 = vector.load %arg6[%c0_12, %c0_13] : memref<128x128xbf16, #tpu.memory_space<vmem>>, vector<128x128xbf16>
    %cst_14 = arith.constant dense<0.000000e+00> : vector<16x128xf32>
    %19 = tpu.matmul %17, %18, %cst_14 {dimension_numbers = #tpu.dot_dimension_numbers<[1], [0], [0], [1], [0, 0, 1, 1], [], []>} : vector<16x128xbf16>, vector<128x128xbf16>, vector<16x128xf32> -> vector<16x128xf32>
    %c0_15 = arith.constant 0 : index
    %c0_16 = arith.constant 0 : index
    %20 = vector.load %arg7[%c0_15, %c0_16] : memref<1x128xf32, #tpu.memory_space<vmem>>, vector<1x128xf32>
    %21 = vector.broadcast %20 : vector<1x128xf32> to vector<16x128xf32>
    %22 = arith.addf %19, %21 : vector<16x128xf32>
    %c0_17 = arith.constant 0 : index
    %c0_18 = arith.constant 0 : index
    %23 = vector.load %arg8[%c0_17, %c0_18] : memref<16x128xf32, #tpu.memory_space<vmem>>, vector<16x128xf32>
    tpu.vector_store %arg8[%c0_17, %c0_18], %22 {strides = array<i32>} : memref<16x128xf32, #tpu.memory_space<vmem>>, vector<16x128xf32>,
    return
  }
  func.func @transform_0(%arg0: i32) -> (i32, i32) {
    %c0_i32 = arith.constant 0 : i32
    %c0_i32_0 = arith.constant 0 : i32
    return %arg0, %c0_i32 : i32, i32
  }
  func.func @transform_1(%arg0: i32) -> (i32, i32) {
    %c0_i32 = arith.constant 0 : i32
    %c0_i32_0 = arith.constant 0 : i32
    %c0_i32_1 = arith.constant 0 : i32
    return %c0_i32, %c0_i32_0 : i32, i32
  }
  func.func @transform_2(%arg0: i32) -> (i32, i32) {
    %c0_i32 = arith.constant 0 : i32
    %c0_i32_0 = arith.constant 0 : i32
    %c0_i32_1 = arith.constant 0 : i32
    return %c0_i32, %c0_i32_0 : i32, i32
  }
  func.func @transform_3(%arg0: i32) -> (i32, i32) {
    %c0_i32 = arith.constant 0 : i32
    %c0_i32_0 = arith.constant 0 : i32
    %c0_i32_1 = arith.constant 0 : i32
    return %c0_i32, %c0_i32_0 : i32, i32
  }
  func.func @transform_4(%arg0: i32) -> (i32, i32) {
    %c0_i32 = arith.constant 0 : i32
    %c0_i32_0 = arith.constant 0 : i32
    %c0_i32_1 = arith.constant 0 : i32
    return %c0_i32, %c0_i32_0 : i32, i32
  }
  func.func @transform_5(%arg0: i32) -> (i32, i32) {
    %c0_i32 = arith.constant 0 : i32
    %c0_i32_0 = arith.constant 0 : i32
    %c0_i32_1 = arith.constant 0 : i32
    return %c0_i32, %c0_i32_0 : i32, i32
  }
  func.func @transform_6(%arg0: i32) -> (i32, i32) {
    %c0_i32 = arith.constant 0 : i32
    %c0_i32_0 = arith.constant 0 : i32
    %c0_i32_1 = arith.constant 0 : i32
    return %c0_i32, %c0_i32_0 : i32, i32
  }
  func.func @transform_7(%arg0: i32) -> (i32, i32) {
    %c0_i32 = arith.constant 0 : i32
    %c0_i32_0 = arith.constant 0 : i32
    return %arg0, %c0_i32 : i32, i32
  }
}

module attributes {stable_mosaic.version = 11 : i64} {
  func.func @_mlp_kernel(%arg0: i32, %arg1: memref<16x128xf32, #tpu.memory_space<vmem>>, %arg2: memref<128x128xbf16, #tpu.memory_space<vmem>>, %arg3: memref<1x128xf32, #tpu.memory_space<vmem>>, %arg4: memref<128x128xbf16, #tpu.memory_space<vmem>>, %arg5: memref<1x128xf32, #tpu.memory_space<vmem>>, %arg6: memref<128x128xbf16, #tpu.memory_space<vmem>>, %arg7: memref<1x128xf32, #tpu.memory_space<vmem>>, %arg8: memref<16x128xf32, #tpu.memory_space<vmem>>) attributes {dimension_semantics = [#tpu.dimension_semantics<parallel>], iteration_bounds = array<i64: 1>, scalar_prefetch = 0 : i64, scratch_operands = 0 : i64, tpu.core_type = #tpu.core_type<tc>, window_params = [{transform_indices = @transform_0, window_bounds = array<i64: 16, 128>}, {pipeline_mode = #tpu.pipeline_mode<synchronous>, transform_indices = @transform_1, window_bounds = array<i64: 128, 128>}, {pipeline_mode = #tpu.pipeline_mode<synchronous>, transform_indices = @transform_2, window_bounds = array<i64: 1, 128>}, {pipeline_mode = #tpu.pipeline_mode<synchronous>, transform_indices = @transform_3, window_bounds = array<i64: 128, 128>}, {pipeline_mode = #tpu.pipeline_mode<synchronous>, transform_indices = @transform_4, window_bounds = array<i64: 1, 128>}, {pipeline_mode = #tpu.pipeline_mode<synchronous>, transform_indices = @transform_5, window_bounds = array<i64: 128, 128>}, {pipeline_mode = #tpu.pipeline_mode<synchronous>, transform_indices = @transform_6, window_bounds = array<i64: 1, 128>}, {transform_indices = @transform_7, window_bounds = array<i64: 16, 128>}]} {
    %c0 = arith.constant 0 : index
    %c0_0 = arith.constant 0 : index
    %0 = vector.load %arg1[%c0, %c0_0] : memref<16x128xf32, #tpu.memory_space<vmem>>, vector<16x128xf32>
    %1 = arith.truncf %0 : vector<16x128xf32> to vector<16x128xbf16>
    %c0_1 = arith.constant 0 : index
    %c0_2 = arith.constant 0 : index
    %2 = vector.load %arg2[%c0_1, %c0_2] : memref<128x128xbf16, #tpu.memory_space<vmem>>, vector<128x128xbf16>
    %cst = arith.constant dense<0.000000e+00> : vector<16x128xf32>
    %3 = tpu.matmul %1, %2, %cst {dimension_numbers = #tpu.dot_dimension_numbers<[1], [0], [0], [1], [0, 0, 1, 1], [], []>} : vector<16x128xbf16>, vector<128x128xbf16>, vector<16x128xf32> -> vector<16x128xf32>
    %c0_3 = arith.constant 0 : index
    %c0_4 = arith.constant 0 : index
    %4 = vector.load %arg3[%c0_3, %c0_4] : memref<1x128xf32, #tpu.memory_space<vmem>>, vector<1x128xf32>
    %5 = vector.broadcast %4 : vector<1x128xf32> to vector<16x128xf32>
    %6 = arith.addf %3, %5 : vector<16x128xf32>
    %cst_5 = arith.constant 0.000000e+00 : f32
    %7 = vector.broadcast %cst_5 : f32 to vector<16x128xf32>
    %8 = arith.maximumf %6, %7 : vector<16x128xf32>
    %9 = arith.truncf %8 : vector<16x128xf32> to vector<16x128xbf16>
    %c0_6 = arith.constant 0 : index
    %c0_7 = arith.constant 0 : index
    %10 = vector.load %arg4[%c0_6, %c0_7] : memref<128x128xbf16, #tpu.memory_space<vmem>>, vector<128x128xbf16>
    %cst_8 = arith.constant dense<0.000000e+00> : vector<16x128xf32>
    %11 = tpu.matmul %9, %10, %cst_8 {dimension_numbers = #tpu.dot_dimension_numbers<[1], [0], [0], [1], [0, 0, 1, 1], [], []>} : vector<16x128xbf16>, vector<128x128xbf16>, vector<16x128xf32> -> vector<16x128xf32>
    %c0_9 = arith.constant 0 : index
    %c0_10 = arith.constant 0 : index
    %12 = vector.load %arg5[%c0_9, %c0_10] : memref<1x128xf32, #tpu.memory_space<vmem>>, vector<1x128xf32>
    %13 = vector.broadcast %12 : vector<1x128xf32> to vector<16x128xf32>
    %14 = arith.addf %11, %13 : vector<16x128xf32>
    %cst_11 = arith.constant 0.000000e+00 : f32
    %15 = vector.broadcast %cst_11 : f32 to vector<16x128xf32>
    %16 = arith.maximumf %14, %15 : vector<16x128xf32>
    %17 = arith.truncf %16 : vector<16x128xf32> to vector<16x128xbf16>
    %c0_12 = arith.constant 0 : index
    %c0_13 = arith.constant 0 : index
    %18 = vector.load %arg6[%c0_12, %c0_13] : memref<128x128xbf16, #tpu.memory_space<vmem>>, vector<128x128xbf16>
    %cst_14 = arith.constant dense<0.000000e+00> : vector<16x128xf32>
    %19 = tpu.matmul %17, %18, %cst_14 {dimension_numbers = #tpu.dot_dimension_numbers<[1], [0], [0], [1], [0, 0, 1, 1], [], []>} : vector<16x128xbf16>, vector<128x128xbf16>, vector<16x128xf32> -> vector<16x128xf32>
    %c0_15 = arith.constant 0 : index
    %c0_16 = arith.constant 0 : index
    %20 = vector.load %arg7[%c0_15, %c0_16] : memref<1x128xf32, #tpu.memory_space<vmem>>, vector<1x128xf32>
    %21 = vector.broadcast %20 : vector<1x128xf32> to vector<16x128xf32>
    %22 = arith.addf %19, %21 : vector<16x128xf32>
    %c0_17 = arith.constant 0 : index
    %c0_18 = arith.constant 0 : index
    %23 = vector.load %arg8[%c0_17, %c0_18] : memref<16x128xf32, #tpu.memory_space<vmem>>, vector<16x128xf32>
    tpu.vector_store %arg8[%c0_17, %c0_18], %22 {strides = array<i32>} : memref<16x128xf32, #tpu.memory_space<vmem>>, vector<16x128xf32>,
    return
  }
  func.func @transform_0(%arg0: i32) -> (i32, i32) {
    %c0_i32 = arith.constant 0 : i32
    %c0_i32_0 = arith.constant 0 : i32
    return %arg0, %c0_i32 : i32, i32
  }
  func.func @transform_1(%arg0: i32) -> (i32, i32) {
    %c0_i32 = arith.constant 0 : i32
    %c0_i32_0 = arith.constant 0 : i32
    %c0_i32_1 = arith.constant 0 : i32
    return %c0_i32, %c0_i32_0 : i32, i32
  }
  func.func @transform_2(%arg0: i32) -> (i32, i32) {
    %c0_i32 = arith.constant 0 : i32
    %c0_i32_0 = arith.constant 0 : i32
    %c0_i32_1 = arith.constant 0 : i32
    return %c0_i32, %c0_i32_0 : i32, i32
  }
  func.func @transform_3(%arg0: i32) -> (i32, i32) {
    %c0_i32 = arith.constant 0 : i32
    %c0_i32_0 = arith.constant 0 : i32
    %c0_i32_1 = arith.constant 0 : i32
    return %c0_i32, %c0_i32_0 : i32, i32
  }
  func.func @transform_4(%arg0: i32) -> (i32, i32) {
    %c0_i32 = arith.constant 0 : i32
    %c0_i32_0 = arith.constant 0 : i32
    %c0_i32_1 = arith.constant 0 : i32
    return %c0_i32, %c0_i32_0 : i32, i32
  }
  func.func @transform_5(%arg0: i32) -> (i32, i32) {
    %c0_i32 = arith.constant 0 : i32
    %c0_i32_0 = arith.constant 0 : i32
    %c0_i32_1 = arith.constant 0 : i32
    return %c0_i32, %c0_i32_0 : i32, i32
  }
  func.func @transform_6(%arg0: i32) -> (i32, i32) {
    %c0_i32 = arith.constant 0 : i32
    %c0_i32_0 = arith.constant 0 : i32
    %c0_i32_1 = arith.constant 0 : i32
    return %c0_i32, %c0_i32_0 : i32, i32
  }
  func.func @transform_7(%arg0: i32) -> (i32, i32) {
    %c0_i32 = arith.constant 0 : i32
    %c0_i32_0 = arith.constant 0 : i32
    return %arg0, %c0_i32 : i32, i32
  }
}

</mosaic_0001>

<llo_original>
// kernel: _forward_impl.1
$region0: #{_forward_impl.1}
  #allocation0 [shape = 'u32[]', space=smem, size = 0x4, offset = 0x4, fixed_abs, tag = 'smem constant byte address 0x4 - core index']
  #allocation1 [shape = 'u32[144,128]{1,0:T(1,128)}', space=vmem, size = 0x12000, scoped, tag = 'internal scratch']
  %s0 = inlined_call_operand.vmem [shape: f32[16,128], index: 0, kind: input, shape index: {}]
  %s1 = inlined_call_operand.vmem [shape: bf16[128,128], index: 1, kind: input, shape index: {}]
  %s2 = inlined_call_operand.vmem [shape: f32[1,128], index: 2, kind: input, shape index: {}]
  %s3 = inlined_call_operand.vmem [shape: bf16[128,128], index: 3, kind: input, shape index: {}]
  %s4 = inlined_call_operand.vmem [shape: f32[1,128], index: 4, kind: input, shape index: {}]
  %s5 = inlined_call_operand.vmem [shape: bf16[128,128], index: 5, kind: input, shape index: {}]
  %s6 = inlined_call_operand.vmem [shape: f32[1,128], index: 6, kind: input, shape index: {}]
  %s7 = inlined_call_operand.vmem [shape: f32[16,128], index: 7, kind: output, shape index: {}]
  %s8 = sld [smem:[#allocation0]]
  $region38: #{_forward_impl.1} parent=0
    _
  %s10 = ssub.s32 1, %s8
  %s11 = scalar_select 0, %s10, %s8
  // Predicated region
  $region2: #{_forward_impl.1} parent=0 // pred_check
    _
  $region3: #{_forward_impl.1} parent=0 // pred_check_branch
    %13 = sbr.rel (0) target = $region5
  $region4: #{_forward_impl.1} parent=0 // pred_region
    _
  $region5: #{_forward_impl.1} parent=0 // pred_fallthru
    _
  // Predicated region
  $region6: #{_forward_impl.1} parent=0 // pred_check
    _
  $region7: #{_forward_impl.1} parent=0 // pred_check_branch
    %15 = sbr.rel (0) target = $region9
  $region8: #{_forward_impl.1} parent=0 // pred_region
    _
  $region9: #{_forward_impl.1} parent=0 // pred_fallthru
    _
  // Predicated region
  $region10: #{_forward_impl.1} parent=0 // pred_check
    _
  $region11: #{_forward_impl.1} parent=0 // pred_check_branch
    %17 = sbr.rel (0) target = $region13
  $region12: #{_forward_impl.1} parent=0 // pred_region
    _
  $region13: #{_forward_impl.1} parent=0 // pred_fallthru
    _
  // Predicated region
  $region14: #{_forward_impl.1} parent=0 // pred_check
    _
  $region15: #{_forward_impl.1} parent=0 // pred_check_branch
    %19 = sbr.rel (0) target = $region17
  $region16: #{_forward_impl.1} parent=0 // pred_region
    _
  $region17: #{_forward_impl.1} parent=0 // pred_fallthru
    _
  // Predicated region
  $region18: #{_forward_impl.1} parent=0 // pred_check
    _
  $region19: #{_forward_impl.1} parent=0 // pred_check_branch
    %21 = sbr.rel (0) target = $region21
  $region20: #{_forward_impl.1} parent=0 // pred_region
    _
  $region21: #{_forward_impl.1} parent=0 // pred_fallthru
    _
  // Predicated region
  $region22: #{_forward_impl.1} parent=0 // pred_check
    _
  $region23: #{_forward_impl.1} parent=0 // pred_check_branch
    %23 = sbr.rel (0) target = $region25
  $region24: #{_forward_impl.1} parent=0 // pred_region
    _
  $region25: #{_forward_impl.1} parent=0 // pred_fallthru
    _
  // Predicated region
  $region26: #{_forward_impl.1} parent=0 // pred_check
    _
  $region27: #{_forward_impl.1} parent=0 // pred_check_branch
    %25 = sbr.rel (0) target = $region29
  $region28: #{_forward_impl.1} parent=0 // pred_region
    _
  $region29: #{_forward_impl.1} parent=0 // pred_fallthru
    _
  %v27 = vld [vmem:[%s0] sm:$0xff]
  %v28 = vld [vmem:[%s0 + $0x8] sm:$0xff]
  %v29 = vpack.c.bf16 %v28, %v27
  %v30 = vld [vmem:[%s1] sm:$0xf]
  %v31 = vld [vmem:[%s1 + $0x4] sm:$0xf]
  %v32 = vld [vmem:[%s1 + $0x8] sm:$0xf]
  %v33 = vld [vmem:[%s1 + $0xc] sm:$0xf]
  %v34 = vld [vmem:[%s1 + $0x10] sm:$0xf]
  %v35 = vld [vmem:[%s1 + $0x14] sm:$0xf]
  %v36 = vld [vmem:[%s1 + $0x18] sm:$0xf]
  %v37 = vld [vmem:[%s1 + $0x1c] sm:$0xf]
  %v38 = vld [vmem:[%s1 + $0x20] sm:$0xf]
  %v39 = vld [vmem:[%s1 + $0x24] sm:$0xf]
  %v40 = vld [vmem:[%s1 + $0x28] sm:$0xf]
  %v41 = vld [vmem:[%s1 + $0x2c] sm:$0xf]
  %v42 = vld [vmem:[%s1 + $0x30] sm:$0xf]
  %v43 = vld [vmem:[%s1 + $0x34] sm:$0xf]
  %v44 = vld [vmem:[%s1 + $0x38] sm:$0xf]
  %v45 = vld [vmem:[%s1 + $0x3c] sm:$0xf]
  %v46 = vld [vmem:[%s2] sm:$0x1]
  %v48 = vlaneseq
  %v49 = vshrl.u32 %v48, 7
  %v50 = vsub.s32 0, %v49
  %v51 = vrot.slane %v46, %v50
  %v69 = vunpack.c.l.b16 %v30
  %v70 = vunpack.c.l.b16 %v31
  %v71 = vunpack.c.l.b16 %v32
  %v72 = vunpack.c.l.b16 %v33
  %v73 = vunpack.c.l.b16 %v34
  %v74 = vunpack.c.l.b16 %v35
  %v75 = vunpack.c.l.b16 %v36
  %v76 = vunpack.c.l.b16 %v37
  %v77 = vunpack.c.l.b16 %v38
  %v78 = vunpack.c.l.b16 %v39
  %v79 = vunpack.c.l.b16 %v40
  %v80 = vunpack.c.l.b16 %v41
  %v81 = vunpack.c.l.b16 %v42
  %v82 = vunpack.c.l.b16 %v43
  %v83 = vunpack.c.l.b16 %v44
  %v84 = vunpack.c.l.b16 %v45
  %v85 = vpack.c.b16 %v70, %v69
  %v86 = vpack.c.b16 %v72, %v71
  %v87 = vpack.c.b16 %v74, %v73
  %v88 = vpack.c.b16 %v76, %v75
  %v89 = vpack.c.b16 %v78, %v77
  %v90 = vpack.c.b16 %v80, %v79
  %v91 = vpack.c.b16 %v82, %v81
  %v92 = vpack.c.b16 %v84, %v83
  %101 = vmatprep.subr.bf16.mxu0 0
  %102 = vmatpush1.bf16.msra.mxu0 %v85
  %103 = vmatprep.subr.bf16.mxu0 0
  %104 = vmatpush1.bf16.msra.mxu0 %v86
  %105 = vmatprep.subr.bf16.mxu0 0
  %106 = vmatpush1.bf16.msra.mxu0 %v87
  %107 = vmatprep.subr.bf16.mxu0 0
  %108 = vmatpush1.bf16.msra.mxu0 %v88
  %109 = vmatprep.subr.bf16.mxu0 0
  %110 = vmatpush1.bf16.msra.mxu0 %v89
  %111 = vmatprep.subr.bf16.mxu0 0
  %112 = vmatpush1.bf16.msra.mxu0 %v90
  %113 = vmatprep.subr.bf16.mxu0 0
  %114 = vmatpush1.bf16.msra.mxu0 %v91
  %115 = vmatprep.subr.bf16.mxu0 0
  %116 = vmatpush1.bf16.msra.mxu0 %v92
  %117 = vmatprep.subr.bf16.mxu0 0
  %118 = vmatpush1.bf16.msra.mxu0 0
  %119 = vmatprep.subr.bf16.mxu0 0
  %120 = vmatpush1.bf16.msra.mxu0 0
  %121 = vmatprep.subr.bf16.mxu0 0
  %122 = vmatpush1.bf16.msra.mxu0 0
  %123 = vmatprep.subr.bf16.mxu0 0
  %124 = vmatpush1.bf16.msra.mxu0 0
  %125 = vmatprep.subr.bf16.mxu0 0
  %126 = vmatpush1.bf16.msra.mxu0 0
  %127 = vmatprep.subr.bf16.mxu0 0
  %128 = vmatpush1.bf16.msra.mxu0 0
  %129 = vmatprep.subr.bf16.mxu0 0
  %130 = vmatpush1.bf16.msra.mxu0 0
  %131 = vmatprep.subr.bf16.mxu0 0
  %132 = vmatpush1.bf16.msra.mxu0 0
  %133 = vmatprep.mubr.bf16.mxu0 0
  %134 = vmatmul.mubr.bf16.gmra.mrb[0].mxu0 %v29
  %v135 = vpop.f32.mrb[0].mxu0
  %v136 = vadd.f32 %v51, %v135
  %v137 = vpop.f32.mrb[0].mxu0
  %v138 = vpop.f32.mrb[0].mxu0
  %v139 = vadd.f32 %v51, %v138
  %v140 = vpop.f32.mrb[0].mxu0
  %141 = vdwg.mxu0
  %v142 = vmax.f32 %v136, 0.0
  %v143 = vmax.f32 %v139, 0.0
  %v144 = vpack.c.bf16 %v143, %v142
  %v145 = vld [vmem:[%s3] sm:$0xf]
  %v146 = vld [vmem:[%s3 + $0x4] sm:$0xf]
  %v147 = vld [vmem:[%s3 + $0x8] sm:$0xf]
  %v148 = vld [vmem:[%s3 + $0xc] sm:$0xf]
  %v149 = vld [vmem:[%s3 + $0x10] sm:$0xf]
  %v150 = vld [vmem:[%s3 + $0x14] sm:$0xf]
  %v151 = vld [vmem:[%s3 + $0x18] sm:$0xf]
  %v152 = vld [vmem:[%s3 + $0x1c] sm:$0xf]
  %v153 = vld [vmem:[%s3 + $0x20] sm:$0xf]
  %v154 = vld [vmem:[%s3 + $0x24] sm:$0xf]
  %v155 = vld [vmem:[%s3 + $0x28] sm:$0xf]
  %v156 = vld [vmem:[%s3 + $0x2c] sm:$0xf]
  %v157 = vld [vmem:[%s3 + $0x30] sm:$0xf]
  %v158 = vld [vmem:[%s3 + $0x34] sm:$0xf]
  %v159 = vld [vmem:[%s3 + $0x38] sm:$0xf]
  %v160 = vld [vmem:[%s3 + $0x3c] sm:$0xf]
  %v161 = vld [vmem:[%s4] sm:$0x1]
  %v163 = vlaneseq
  %v164 = vshrl.u32 %v163, 7
  %v165 = vsub.s32 0, %v164
  %v166 = vrot.slane %v161, %v165
  %v184 = vunpack.c.l.b16 %v145
  %v185 = vunpack.c.l.b16 %v146
  %v186 = vunpack.c.l.b16 %v147
  %v187 = vunpack.c.l.b16 %v148
  %v188 = vunpack.c.l.b16 %v149
  %v189 = vunpack.c.l.b16 %v150
  %v190 = vunpack.c.l.b16 %v151
  %v191 = vunpack.c.l.b16 %v152
  %v192 = vunpack.c.l.b16 %v153
  %v193 = vunpack.c.l.b16 %v154
  %v194 = vunpack.c.l.b16 %v155
  %v195 = vunpack.c.l.b16 %v156
  %v196 = vunpack.c.l.b16 %v157
  %v197 = vunpack.c.l.b16 %v158
  %v198 = vunpack.c.l.b16 %v159
  %v199 = vunpack.c.l.b16 %v160
  %v200 = vpack.c.b16 %v185, %v184
  %v201 = vpack.c.b16 %v187, %v186
  %v202 = vpack.c.b16 %v189, %v188
  %v203 = vpack.c.b16 %v191, %v190
  %v204 = vpack.c.b16 %v193, %v192
  %v205 = vpack.c.b16 %v195, %v194
  %v206 = vpack.c.b16 %v197, %v196
  %v207 = vpack.c.b16 %v199, %v198
  %216 = vmatprep.subr.bf16.mxu0 0
  %217 = vmatpush1.bf16.msra.mxu0 %v200
  %218 = vmatprep.subr.bf16.mxu0 0
  %219 = vmatpush1.bf16.msra.mxu0 %v201
  %220 = vmatprep.subr.bf16.mxu0 0
  %221 = vmatpush1.bf16.msra.mxu0 %v202
  %222 = vmatprep.subr.bf16.mxu0 0
  %223 = vmatpush1.bf16.msra.mxu0 %v203
  %224 = vmatprep.subr.bf16.mxu0 0
  %225 = vmatpush1.bf16.msra.mxu0 %v204
  %226 = vmatprep.subr.bf16.mxu0 0
  %227 = vmatpush1.bf16.msra.mxu0 %v205
  %228 = vmatprep.subr.bf16.mxu0 0
  %229 = vmatpush1.bf16.msra.mxu0 %v206
  %230 = vmatprep.subr.bf16.mxu0 0
  %231 = vmatpush1.bf16.msra.mxu0 %v207
  %232 = vmatprep.subr.bf16.mxu0 0
  %233 = vmatpush1.bf16.msra.mxu0 0
  %234 = vmatprep.subr.bf16.mxu0 0
  %235 = vmatpush1.bf16.msra.mxu0 0
  %236 = vmatprep.subr.bf16.mxu0 0
  %237 = vmatpush1.bf16.msra.mxu0 0
  %238 = vmatprep.subr.bf16.mxu0 0
  %239 = vmatpush1.bf16.msra.mxu0 0
  %240 = vmatprep.subr.bf16.mxu0 0
  %241 = vmatpush1.bf16.msra.mxu0 0
  %242 = vmatprep.subr.bf16.mxu0 0
  %243 = vmatpush1.bf16.msra.mxu0 0
  %244 = vmatprep.subr.bf16.mxu0 0
  %245 = vmatpush1.bf16.msra.mxu0 0
  %246 = vmatprep.subr.bf16.mxu0 0
  %247 = vmatpush1.bf16.msra.mxu0 0
  %248 = vmatprep.mubr.bf16.mxu0 0
  %249 = vmatmul.mubr.bf16.gmra.mrb[0].mxu0 %v144
  %v250 = vpop.f32.mrb[0].mxu0
  %v251 = vadd.f32 %v166, %v250
  %v252 = vpop.f32.mrb[0].mxu0
  %v253 = vpop.f32.mrb[0].mxu0
  %v254 = vadd.f32 %v166, %v253
  %v255 = vpop.f32.mrb[0].mxu0
  %256 = vdwg.mxu0
  %v257 = vmax.f32 %v251, 0.0
  %v258 = vmax.f32 %v254, 0.0
  %v259 = vpack.c.bf16 %v258, %v257
  %v260 = vld [vmem:[%s5] sm:$0xf]
  %v261 = vld [vmem:[%s5 + $0x4] sm:$0xf]
  %v262 = vld [vmem:[%s5 + $0x8] sm:$0xf]
  %v263 = vld [vmem:[%s5 + $0xc] sm:$0xf]
  %v264 = vld [vmem:[%s5 + $0x10] sm:$0xf]
  %v265 = vld [vmem:[%s5 + $0x14] sm:$0xf]
  %v266 = vld [vmem:[%s5 + $0x18] sm:$0xf]
  %v267 = vld [vmem:[%s5 + $0x1c] sm:$0xf]
  %v268 = vld [vmem:[%s5 + $0x20] sm:$0xf]
  %v269 = vld [vmem:[%s5 + $0x24] sm:$0xf]
  %v270 = vld [vmem:[%s5 + $0x28] sm:$0xf]
  %v271 = vld [vmem:[%s5 + $0x2c] sm:$0xf]
  %v272 = vld [vmem:[%s5 + $0x30] sm:$0xf]
  %v273 = vld [vmem:[%s5 + $0x34] sm:$0xf]
  %v274 = vld [vmem:[%s5 + $0x38] sm:$0xf]
  %v275 = vld [vmem:[%s5 + $0x3c] sm:$0xf]
  %v276 = vld [vmem:[%s6] sm:$0x1]
  %v278 = vlaneseq
  %v279 = vshrl.u32 %v278, 7
  %v280 = vsub.s32 0, %v279
  %v281 = vrot.slane %v276, %v280
  %v299 = vunpack.c.l.b16 %v260
  %v300 = vunpack.c.l.b16 %v261
  %v301 = vunpack.c.l.b16 %v262
  %v302 = vunpack.c.l.b16 %v263
  %v303 = vunpack.c.l.b16 %v264
  %v304 = vunpack.c.l.b16 %v265
  %v305 = vunpack.c.l.b16 %v266
  %v306 = vunpack.c.l.b16 %v267
  %v307 = vunpack.c.l.b16 %v268
  %v308 = vunpack.c.l.b16 %v269
  %v309 = vunpack.c.l.b16 %v270
  %v310 = vunpack.c.l.b16 %v271
  %v311 = vunpack.c.l.b16 %v272
  %v312 = vunpack.c.l.b16 %v273
  %v313 = vunpack.c.l.b16 %v274
  %v314 = vunpack.c.l.b16 %v275
  %v315 = vpack.c.b16 %v300, %v299
  %v316 = vpack.c.b16 %v302, %v301
  %v317 = vpack.c.b16 %v304, %v303
  %v318 = vpack.c.b16 %v306, %v305
  %v319 = vpack.c.b16 %v308, %v307
  %v320 = vpack.c.b16 %v310, %v309
  %v321 = vpack.c.b16 %v312, %v311
  %v322 = vpack.c.b16 %v314, %v313
  %331 = vmatprep.subr.bf16.mxu0 0
  %332 = vmatpush1.bf16.msra.mxu0 %v315
  %333 = vmatprep.subr.bf16.mxu0 0
  %334 = vmatpush1.bf16.msra.mxu0 %v316
  %335 = vmatprep.subr.bf16.mxu0 0
  %336 = vmatpush1.bf16.msra.mxu0 %v317
  %337 = vmatprep.subr.bf16.mxu0 0
  %338 = vmatpush1.bf16.msra.mxu0 %v318
  %339 = vmatprep.subr.bf16.mxu0 0
  %340 = vmatpush1.bf16.msra.mxu0 %v319
  %341 = vmatprep.subr.bf16.mxu0 0
  %342 = vmatpush1.bf16.msra.mxu0 %v320
  %343 = vmatprep.subr.bf16.mxu0 0
  %344 = vmatpush1.bf16.msra.mxu0 %v321
  %345 = vmatprep.subr.bf16.mxu0 0
  %346 = vmatpush1.bf16.msra.mxu0 %v322
  %347 = vmatprep.subr.bf16.mxu0 0
  %348 = vmatpush1.bf16.msra.mxu0 0
  %349 = vmatprep.subr.bf16.mxu0 0
  %350 = vmatpush1.bf16.msra.mxu0 0
  %351 = vmatprep.subr.bf16.mxu0 0
  %352 = vmatpush1.bf16.msra.mxu0 0
  %353 = vmatprep.subr.bf16.mxu0 0
  %354 = vmatpush1.bf16.msra.mxu0 0
  %355 = vmatprep.subr.bf16.mxu0 0
  %356 = vmatpush1.bf16.msra.mxu0 0
  %357 = vmatprep.subr.bf16.mxu0 0
  %358 = vmatpush1.bf16.msra.mxu0 0
  %359 = vmatprep.subr.bf16.mxu0 0
  %360 = vmatpush1.bf16.msra.mxu0 0
  %361 = vmatprep.subr.bf16.mxu0 0
  %362 = vmatpush1.bf16.msra.mxu0 0
  %363 = vmatprep.mubr.bf16.mxu0 0
  %364 = vmatmul.mubr.bf16.gmra.mrb[0].mxu0 %v259
  %v365 = vpop.f32.mrb[0].mxu0
  %v366 = vadd.f32 %v281, %v365
  %v367 = vpop.f32.mrb[0].mxu0
  %v368 = vpop.f32.mrb[0].mxu0
  %v369 = vadd.f32 %v281, %v368
  %v370 = vpop.f32.mrb[0].mxu0
  %371 = vdwg.mxu0
  %372 = vst [vmem:[%s7] sm:$0xff] %v366
  %373 = vst [vmem:[%s7 + $0x8] sm:$0xff] %v369
  // Predicated region
  $region30: #{_forward_impl.1} parent=0 // pred_check
    _
  $region31: #{_forward_impl.1} parent=0 // pred_check_branch
    %375 = sbr.rel (0) target = $region33
  $region32: #{_forward_impl.1} parent=0 // pred_region
    _
  $region33: #{_forward_impl.1} parent=0 // pred_fallthru
    _
  // Predicated region
  $region34: #{_forward_impl.1} parent=0 // pred_check
    _
  $region35: #{_forward_impl.1} parent=0 // pred_check_branch
    %377 = sbr.rel (0) target = $region37
  $region36: #{_forward_impl.1} parent=0 // pred_region
    _
  $region37: #{_forward_impl.1} parent=0 // pred_fallthru
    _

// kernel: _forward_impl.1
$region0: #{_forward_impl.1}
  #allocation0 [shape = 'u32[]', space=smem, size = 0x4, offset = 0x4, fixed_abs, tag = 'smem constant byte address 0x4 - core index']
  #allocation1 [shape = 'u32[144,128]{1,0:T(1,128)}', space=vmem, size = 0x12000, scoped, tag = 'internal scratch']
  %s0 = inlined_call_operand.vmem [shape: f32[16,128], index: 0, kind: input, shape index: {}]
  %s1 = inlined_call_operand.vmem [shape: bf16[128,128], index: 1, kind: input, shape index: {}]
  %s2 = inlined_call_operand.vmem [shape: f32[1,128], index: 2, kind: input, shape index: {}]
  %s3 = inlined_call_operand.vmem [shape: bf16[128,128], index: 3, kind: input, shape index: {}]
  %s4 = inlined_call_operand.vmem [shape: f32[1,128], index: 4, kind: input, shape index: {}]
  %s5 = inlined_call_operand.vmem [shape: bf16[128,128], index: 5, kind: input, shape index: {}]
  %s6 = inlined_call_operand.vmem [shape: f32[1,128], index: 6, kind: input, shape index: {}]
  %s7 = inlined_call_operand.vmem [shape: f32[16,128], index: 7, kind: output, shape index: {}]
  %s8 = sld [smem:[#allocation0]]
  $region38: #{_forward_impl.1} parent=0
    _
  %s10 = ssub.s32 1, %s8
  %s11 = scalar_select 0, %s10, %s8
  // Predicated region
  $region2: #{_forward_impl.1} parent=0 // pred_check
    _
  $region3: #{_forward_impl.1} parent=0 // pred_check_branch
    %13 = sbr.rel (0) target = $region5
  $region4: #{_forward_impl.1} parent=0 // pred_region
    _
  $region5: #{_forward_impl.1} parent=0 // pred_fallthru
    _
  // Predicated region
  $region6: #{_forward_impl.1} parent=0 // pred_check
    _
  $region7: #{_forward_impl.1} parent=0 // pred_check_branch
    %15 = sbr.rel (0) target = $region9
  $region8: #{_forward_impl.1} parent=0 // pred_region
    _
  $region9: #{_forward_impl.1} parent=0 // pred_fallthru
    _
  // Predicated region
  $region10: #{_forward_impl.1} parent=0 // pred_check
    _
  $region11: #{_forward_impl.1} parent=0 // pred_check_branch
    %17 = sbr.rel (0) target = $region13
  $region12: #{_forward_impl.1} parent=0 // pred_region
    _
  $region13: #{_forward_impl.1} parent=0 // pred_fallthru
    _
  // Predicated region
  $region14: #{_forward_impl.1} parent=0 // pred_check
    _
  $region15: #{_forward_impl.1} parent=0 // pred_check_branch
    %19 = sbr.rel (0) target = $region17
  $region16: #{_forward_impl.1} parent=0 // pred_region
    _
  $region17: #{_forward_impl.1} parent=0 // pred_fallthru
    _
  // Predicated region
  $region18: #{_forward_impl.1} parent=0 // pred_check
    _
  $region19: #{_forward_impl.1} parent=0 // pred_check_branch
    %21 = sbr.rel (0) target = $region21
  $region20: #{_forward_impl.1} parent=0 // pred_region
    _
  $region21: #{_forward_impl.1} parent=0 // pred_fallthru
    _
  // Predicated region
  $region22: #{_forward_impl.1} parent=0 // pred_check
    _
  $region23: #{_forward_impl.1} parent=0 // pred_check_branch
    %23 = sbr.rel (0) target = $region25
  $region24: #{_forward_impl.1} parent=0 // pred_region
    _
  $region25: #{_forward_impl.1} parent=0 // pred_fallthru
    _
  // Predicated region
  $region26: #{_forward_impl.1} parent=0 // pred_check
    _
  $region27: #{_forward_impl.1} parent=0 // pred_check_branch
    %25 = sbr.rel (0) target = $region29
  $region28: #{_forward_impl.1} parent=0 // pred_region
    _
  $region29: #{_forward_impl.1} parent=0 // pred_fallthru
    _
  %v27 = vld [vmem:[%s0] sm:$0xff]
  %v28 = vld [vmem:[%s0 + $0x8] sm:$0xff]
  %v29 = vpack.c.bf16 %v28, %v27
  %v30 = vld [vmem:[%s1] sm:$0xf]
  %v31 = vld [vmem:[%s1 + $0x4] sm:$0xf]
  %v32 = vld [vmem:[%s1 + $0x8] sm:$0xf]
  %v33 = vld [vmem:[%s1 + $0xc] sm:$0xf]
  %v34 = vld [vmem:[%s1 + $0x10] sm:$0xf]
  %v35 = vld [vmem:[%s1 + $0x14] sm:$0xf]
  %v36 = vld [vmem:[%s1 + $0x18] sm:$0xf]
  %v37 = vld [vmem:[%s1 + $0x1c] sm:$0xf]
  %v38 = vld [vmem:[%s1 + $0x20] sm:$0xf]
  %v39 = vld [vmem:[%s1 + $0x24] sm:$0xf]
  %v40 = vld [vmem:[%s1 + $0x28] sm:$0xf]
  %v41 = vld [vmem:[%s1 + $0x2c] sm:$0xf]
  %v42 = vld [vmem:[%s1 + $0x30] sm:$0xf]
  %v43 = vld [vmem:[%s1 + $0x34] sm:$0xf]
  %v44 = vld [vmem:[%s1 + $0x38] sm:$0xf]
  %v45 = vld [vmem:[%s1 + $0x3c] sm:$0xf]
  %v46 = vld [vmem:[%s2] sm:$0x1]
  %v48 = vlaneseq
  %v49 = vshrl.u32 %v48, 7
  %v50 = vsub.s32 0, %v49
  %v51 = vrot.slane %v46, %v50
  %v69 = vunpack.c.l.b16 %v30
  %v70 = vunpack.c.l.b16 %v31
  %v71 = vunpack.c.l.b16 %v32
  %v72 = vunpack.c.l.b16 %v33
  %v73 = vunpack.c.l.b16 %v34
  %v74 = vunpack.c.l.b16 %v35
  %v75 = vunpack.c.l.b16 %v36
  %v76 = vunpack.c.l.b16 %v37
  %v77 = vunpack.c.l.b16 %v38
  %v78 = vunpack.c.l.b16 %v39
  %v79 = vunpack.c.l.b16 %v40
  %v80 = vunpack.c.l.b16 %v41
  %v81 = vunpack.c.l.b16 %v42
  %v82 = vunpack.c.l.b16 %v43
  %v83 = vunpack.c.l.b16 %v44
  %v84 = vunpack.c.l.b16 %v45
  %v85 = vpack.c.b16 %v70, %v69
  %v86 = vpack.c.b16 %v72, %v71
  %v87 = vpack.c.b16 %v74, %v73
  %v88 = vpack.c.b16 %v76, %v75
  %v89 = vpack.c.b16 %v78, %v77
  %v90 = vpack.c.b16 %v80, %v79
  %v91 = vpack.c.b16 %v82, %v81
  %v92 = vpack.c.b16 %v84, %v83
  %101 = vmatprep.subr.bf16.mxu0 0
  %102 = vmatpush1.bf16.msra.mxu0 %v85
  %103 = vmatprep.subr.bf16.mxu0 0
  %104 = vmatpush1.bf16.msra.mxu0 %v86
  %105 = vmatprep.subr.bf16.mxu0 0
  %106 = vmatpush1.bf16.msra.mxu0 %v87
  %107 = vmatprep.subr.bf16.mxu0 0
  %108 = vmatpush1.bf16.msra.mxu0 %v88
  %109 = vmatprep.subr.bf16.mxu0 0
  %110 = vmatpush1.bf16.msra.mxu0 %v89
  %111 = vmatprep.subr.bf16.mxu0 0
  %112 = vmatpush1.bf16.msra.mxu0 %v90
  %113 = vmatprep.subr.bf16.mxu0 0
  %114 = vmatpush1.bf16.msra.mxu0 %v91
  %115 = vmatprep.subr.bf16.mxu0 0
  %116 = vmatpush1.bf16.msra.mxu0 %v92
  %117 = vmatprep.subr.bf16.mxu0 0
  %118 = vmatpush1.bf16.msra.mxu0 0
  %119 = vmatprep.subr.bf16.mxu0 0
  %120 = vmatpush1.bf16.msra.mxu0 0
  %121 = vmatprep.subr.bf16.mxu0 0
  %122 = vmatpush1.bf16.msra.mxu0 0
  %123 = vmatprep.subr.bf16.mxu0 0
  %124 = vmatpush1.bf16.msra.mxu0 0
  %125 = vmatprep.subr.bf16.mxu0 0
  %126 = vmatpush1.bf16.msra.mxu0 0
  %127 = vmatprep.subr.bf16.mxu0 0
  %128 = vmatpush1.bf16.msra.mxu0 0
  %129 = vmatprep.subr.bf16.mxu0 0
  %130 = vmatpush1.bf16.msra.mxu0 0
  %131 = vmatprep.subr.bf16.mxu0 0
  %132 = vmatpush1.bf16.msra.mxu0 0
  %133 = vmatprep.mubr.bf16.mxu0 0
  %134 = vmatmul.mubr.bf16.gmra.mrb[0].mxu0 %v29
  %v135 = vpop.f32.mrb[0].mxu0
  %v136 = vadd.f32 %v51, %v135
  %v137 = vpop.f32.mrb[0].mxu0
  %v138 = vpop.f32.mrb[0].mxu0
  %v139 = vadd.f32 %v51, %v138
  %v140 = vpop.f32.mrb[0].mxu0
  %141 = vdwg.mxu0
  %v142 = vmax.f32 %v136, 0.0
  %v143 = vmax.f32 %v139, 0.0
  %v144 = vpack.c.bf16 %v143, %v142
  %v145 = vld [vmem:[%s3] sm:$0xf]
  %v146 = vld [vmem:[%s3 + $0x4] sm:$0xf]
  %v147 = vld [vmem:[%s3 + $0x8] sm:$0xf]
  %v148 = vld [vmem:[%s3 + $0xc] sm:$0xf]
  %v149 = vld [vmem:[%s3 + $0x10] sm:$0xf]
  %v150 = vld [vmem:[%s3 + $0x14] sm:$0xf]
  %v151 = vld [vmem:[%s3 + $0x18] sm:$0xf]
  %v152 = vld [vmem:[%s3 + $0x1c] sm:$0xf]
  %v153 = vld [vmem:[%s3 + $0x20] sm:$0xf]
  %v154 = vld [vmem:[%s3 + $0x24] sm:$0xf]
  %v155 = vld [vmem:[%s3 + $0x28] sm:$0xf]
  %v156 = vld [vmem:[%s3 + $0x2c] sm:$0xf]
  %v157 = vld [vmem:[%s3 + $0x30] sm:$0xf]
  %v158 = vld [vmem:[%s3 + $0x34] sm:$0xf]
  %v159 = vld [vmem:[%s3 + $0x38] sm:$0xf]
  %v160 = vld [vmem:[%s3 + $0x3c] sm:$0xf]
  %v161 = vld [vmem:[%s4] sm:$0x1]
  %v163 = vlaneseq
  %v164 = vshrl.u32 %v163, 7
  %v165 = vsub.s32 0, %v164
  %v166 = vrot.slane %v161, %v165
  %v184 = vunpack.c.l.b16 %v145
  %v185 = vunpack.c.l.b16 %v146
  %v186 = vunpack.c.l.b16 %v147
  %v187 = vunpack.c.l.b16 %v148
  %v188 = vunpack.c.l.b16 %v149
  %v189 = vunpack.c.l.b16 %v150
  %v190 = vunpack.c.l.b16 %v151
  %v191 = vunpack.c.l.b16 %v152
  %v192 = vunpack.c.l.b16 %v153
  %v193 = vunpack.c.l.b16 %v154
  %v194 = vunpack.c.l.b16 %v155
  %v195 = vunpack.c.l.b16 %v156
  %v196 = vunpack.c.l.b16 %v157
  %v197 = vunpack.c.l.b16 %v158
  %v198 = vunpack.c.l.b16 %v159
  %v199 = vunpack.c.l.b16 %v160
  %v200 = vpack.c.b16 %v185, %v184
  %v201 = vpack.c.b16 %v187, %v186
  %v202 = vpack.c.b16 %v189, %v188
  %v203 = vpack.c.b16 %v191, %v190
  %v204 = vpack.c.b16 %v193, %v192
  %v205 = vpack.c.b16 %v195, %v194
  %v206 = vpack.c.b16 %v197, %v196
  %v207 = vpack.c.b16 %v199, %v198
  %216 = vmatprep.subr.bf16.mxu0 0
  %217 = vmatpush1.bf16.msra.mxu0 %v200
  %218 = vmatprep.subr.bf16.mxu0 0
  %219 = vmatpush1.bf16.msra.mxu0 %v201
  %220 = vmatprep.subr.bf16.mxu0 0
  %221 = vmatpush1.bf16.msra.mxu0 %v202
  %222 = vmatprep.subr.bf16.mxu0 0
  %223 = vmatpush1.bf16.msra.mxu0 %v203
  %224 = vmatprep.subr.bf16.mxu0 0
  %225 = vmatpush1.bf16.msra.mxu0 %v204
  %226 = vmatprep.subr.bf16.mxu0 0
  %227 = vmatpush1.bf16.msra.mxu0 %v205
  %228 = vmatprep.subr.bf16.mxu0 0
  %229 = vmatpush1.bf16.msra.mxu0 %v206
  %230 = vmatprep.subr.bf16.mxu0 0
  %231 = vmatpush1.bf16.msra.mxu0 %v207
  %232 = vmatprep.subr.bf16.mxu0 0
  %233 = vmatpush1.bf16.msra.mxu0 0
  %234 = vmatprep.subr.bf16.mxu0 0
  %235 = vmatpush1.bf16.msra.mxu0 0
  %236 = vmatprep.subr.bf16.mxu0 0
  %237 = vmatpush1.bf16.msra.mxu0 0
  %238 = vmatprep.subr.bf16.mxu0 0
  %239 = vmatpush1.bf16.msra.mxu0 0
  %240 = vmatprep.subr.bf16.mxu0 0
  %241 = vmatpush1.bf16.msra.mxu0 0
  %242 = vmatprep.subr.bf16.mxu0 0
  %243 = vmatpush1.bf16.msra.mxu0 0
  %244 = vmatprep.subr.bf16.mxu0 0
  %245 = vmatpush1.bf16.msra.mxu0 0
  %246 = vmatprep.subr.bf16.mxu0 0
  %247 = vmatpush1.bf16.msra.mxu0 0
  %248 = vmatprep.mubr.bf16.mxu0 0
  %249 = vmatmul.mubr.bf16.gmra.mrb[0].mxu0 %v144
  %v250 = vpop.f32.mrb[0].mxu0
  %v251 = vadd.f32 %v166, %v250
  %v252 = vpop.f32.mrb[0].mxu0
  %v253 = vpop.f32.mrb[0].mxu0
  %v254 = vadd.f32 %v166, %v253
  %v255 = vpop.f32.mrb[0].mxu0
  %256 = vdwg.mxu0
  %v257 = vmax.f32 %v251, 0.0
  %v258 = vmax.f32 %v254, 0.0
  %v259 = vpack.c.bf16 %v258, %v257
  %v260 = vld [vmem:[%s5] sm:$0xf]
  %v261 = vld [vmem:[%s5 + $0x4] sm:$0xf]
  %v262 = vld [vmem:[%s5 + $0x8] sm:$0xf]
  %v263 = vld [vmem:[%s5 + $0xc] sm:$0xf]
  %v264 = vld [vmem:[%s5 + $0x10] sm:$0xf]
  %v265 = vld [vmem:[%s5 + $0x14] sm:$0xf]
  %v266 = vld [vmem:[%s5 + $0x18] sm:$0xf]
  %v267 = vld [vmem:[%s5 + $0x1c] sm:$0xf]
  %v268 = vld [vmem:[%s5 + $0x20] sm:$0xf]
  %v269 = vld [vmem:[%s5 + $0x24] sm:$0xf]
  %v270 = vld [vmem:[%s5 + $0x28] sm:$0xf]
  %v271 = vld [vmem:[%s5 + $0x2c] sm:$0xf]
  %v272 = vld [vmem:[%s5 + $0x30] sm:$0xf]
  %v273 = vld [vmem:[%s5 + $0x34] sm:$0xf]
  %v274 = vld [vmem:[%s5 + $0x38] sm:$0xf]
  %v275 = vld [vmem:[%s5 + $0x3c] sm:$0xf]
  %v276 = vld [vmem:[%s6] sm:$0x1]
  %v278 = vlaneseq
  %v279 = vshrl.u32 %v278, 7
  %v280 = vsub.s32 0, %v279
  %v281 = vrot.slane %v276, %v280
  %v299 = vunpack.c.l.b16 %v260
  %v300 = vunpack.c.l.b16 %v261
  %v301 = vunpack.c.l.b16 %v262
  %v302 = vunpack.c.l.b16 %v263
  %v303 = vunpack.c.l.b16 %v264
  %v304 = vunpack.c.l.b16 %v265
  %v305 = vunpack.c.l.b16 %v266
  %v306 = vunpack.c.l.b16 %v267
  %v307 = vunpack.c.l.b16 %v268
  %v308 = vunpack.c.l.b16 %v269
  %v309 = vunpack.c.l.b16 %v270
  %v310 = vunpack.c.l.b16 %v271
  %v311 = vunpack.c.l.b16 %v272
  %v312 = vunpack.c.l.b16 %v273
  %v313 = vunpack.c.l.b16 %v274
  %v314 = vunpack.c.l.b16 %v275
  %v315 = vpack.c.b16 %v300, %v299
  %v316 = vpack.c.b16 %v302, %v301
  %v317 = vpack.c.b16 %v304, %v303
  %v318 = vpack.c.b16 %v306, %v305
  %v319 = vpack.c.b16 %v308, %v307
  %v320 = vpack.c.b16 %v310, %v309
  %v321 = vpack.c.b16 %v312, %v311
  %v322 = vpack.c.b16 %v314, %v313
  %331 = vmatprep.subr.bf16.mxu0 0
  %332 = vmatpush1.bf16.msra.mxu0 %v315
  %333 = vmatprep.subr.bf16.mxu0 0
  %334 = vmatpush1.bf16.msra.mxu0 %v316
  %335 = vmatprep.subr.bf16.mxu0 0
  %336 = vmatpush1.bf16.msra.mxu0 %v317
  %337 = vmatprep.subr.bf16.mxu0 0
  %338 = vmatpush1.bf16.msra.mxu0 %v318
  %339 = vmatprep.subr.bf16.mxu0 0
  %340 = vmatpush1.bf16.msra.mxu0 %v319
  %341 = vmatprep.subr.bf16.mxu0 0
  %342 = vmatpush1.bf16.msra.mxu0 %v320
  %343 = vmatprep.subr.bf16.mxu0 0
  %344 = vmatpush1.bf16.msra.mxu0 %v321
  %345 = vmatprep.subr.bf16.mxu0 0
  %346 = vmatpush1.bf16.msra.mxu0 %v322
  %347 = vmatprep.subr.bf16.mxu0 0
  %348 = vmatpush1.bf16.msra.mxu0 0
  %349 = vmatprep.subr.bf16.mxu0 0
  %350 = vmatpush1.bf16.msra.mxu0 0
  %351 = vmatprep.subr.bf16.mxu0 0
  %352 = vmatpush1.bf16.msra.mxu0 0
  %353 = vmatprep.subr.bf16.mxu0 0
  %354 = vmatpush1.bf16.msra.mxu0 0
  %355 = vmatprep.subr.bf16.mxu0 0
  %356 = vmatpush1.bf16.msra.mxu0 0
  %357 = vmatprep.subr.bf16.mxu0 0
  %358 = vmatpush1.bf16.msra.mxu0 0
  %359 = vmatprep.subr.bf16.mxu0 0
  %360 = vmatpush1.bf16.msra.mxu0 0
  %361 = vmatprep.subr.bf16.mxu0 0
  %362 = vmatpush1.bf16.msra.mxu0 0
  %363 = vmatprep.mubr.bf16.mxu0 0
  %364 = vmatmul.mubr.bf16.gmra.mrb[0].mxu0 %v259
  %v365 = vpop.f32.mrb[0].mxu0
  %v366 = vadd.f32 %v281, %v365
  %v367 = vpop.f32.mrb[0].mxu0
  %v368 = vpop.f32.mrb[0].mxu0
  %v369 = vadd.f32 %v281, %v368
  %v370 = vpop.f32.mrb[0].mxu0
  %371 = vdwg.mxu0
  %372 = vst [vmem:[%s7] sm:$0xff] %v366
  %373 = vst [vmem:[%s7 + $0x8] sm:$0xff] %v369
  // Predicated region
  $region30: #{_forward_impl.1} parent=0 // pred_check
    _
  $region31: #{_forward_impl.1} parent=0 // pred_check_branch
    %375 = sbr.rel (0) target = $region33
  $region32: #{_forward_impl.1} parent=0 // pred_region
    _
  $region33: #{_forward_impl.1} parent=0 // pred_fallthru
    _
  // Predicated region
  $region34: #{_forward_impl.1} parent=0 // pred_check
    _
  $region35: #{_forward_impl.1} parent=0 // pred_check_branch
    %377 = sbr.rel (0) target = $region37
  $region36: #{_forward_impl.1} parent=0 // pred_region
    _
  $region37: #{_forward_impl.1} parent=0 // pred_fallthru
    _

</llo_original>
